<compile_context>
chip_gen: v5e
topology: v5e:2x2
jax: 0.10.0
libtpu: 0.0.40
codegen_flags: <defaults>
</compile_context>

<pallas_src>
import functools

import jax
import jax.numpy as jnp
from jax.experimental import pallas as pl
from jax.experimental.pallas import tpu as pltpu


def _dice_stats_kernel(logits_ref, targets_ref, inter_ref, card_ref, *,
                       C, sub, tm, T, n_chunks, clean_rows, total_rows,
                       mask_vox, static_exact, unroll):
    """Accumulate per-class softmax intersection / cardinality partial sums.

    logits_ref : (C, n_chunks, sub, 128)  voxel tile, native dtype
    targets_ref: (n_chunks, sub, 128)     integer labels
    inter_ref, card_ref: (C, sub, 128) f32 accumulators, resident across the
        reduction grid axis (axis 2).
    """
    t_idx = pl.program_id(2)

    @pl.when(t_idx == 0)
    def _():
        inter_ref[...] = jnp.zeros_like(inter_ref)
        card_ref[...] = jnp.zeros_like(card_ref)

    # Loop invariants hoisted out of the chunk loop (JAX does not CSE these).
    cls = jax.lax.broadcasted_iota(jnp.int32, (C, sub, 128), 0)
    zeros = jnp.zeros((C, sub, 128), jnp.float32)

    def chunk(k, carry, *, masked):
        acc_i, acc_c = carry
        x = logits_ref[:, k, :, :].astype(jnp.float32)      # (C, sub, 128)
        t = targets_ref[k].astype(jnp.int32)                # (sub, 128)

        # Per-voxel softmax over the class axis: C-plane VALU max/add chains
        # plus one EUP exp per class plane -- no cross-lane (XLU) work.
        m = jnp.max(x, axis=0)                              # (sub, 128)
        e = jnp.exp(x - m[None])                            # (C, sub, 128)
        s = jnp.sum(e, axis=0)                              # (sub, 128)
        r = pl.reciprocal(s, approx=True)                   # EUP vrcp (VALU slot stays free)
        r = r * (2.0 - s * r)                               # one Newton step -> f32 accuracy
        p = e * r[None]                                     # softmax probs

        onehot = (cls == t[None]).astype(jnp.float32)
        if masked:
            # Padded voxels carry the sentinel label C: one-hot is already 0,
            # only their probs must be dropped from the cardinality.
            p = p * (t < C).astype(jnp.float32)[None]

        return acc_i + p * onehot, acc_c + (p + onehot)

    if static_exact:
        # Common case: static trip count, fully clean tiles, partial unroll.
        acc = jax.lax.fori_loop(0, n_chunks,
                                functools.partial(chunk, masked=False),
                                (zeros, zeros), unroll=unroll)
    else:
        # Loop bounds exclude garbage / fully-padded rows, so non-final tiles
        # (and the clean prefix of the final tile) never pay any mask work.
        row0 = (pl.program_id(1) * T + t_idx) * tm           # first group-row of this tile
        n_clean = jnp.clip(clean_rows - row0, 0, tm) // sub
        acc = jax.lax.fori_loop(0, n_clean,
                                functools.partial(chunk, masked=False),
                                (zeros, zeros))
        if mask_vox:
            n_used = (jnp.clip(total_rows - row0, 0, tm) + sub - 1) // sub
            acc = jax.lax.fori_loop(n_clean, n_used,
                                    functools.partial(chunk, masked=True), acc)

    acc_i, acc_c = acc
    inter_ref[...] += acc_i
    card_ref[...] += acc_c


@functools.partial(jax.jit, static_argnames=("smooth", "tile_vox"))
def dice_loss(logits, targets, weight=None, smooth=1e-5, tile_vox=262144):
    """Dice loss matching the PyTorch DiceLoss.forward."""
    B, C, D, H, W = logits.shape
    M = D * H * W

    l_item = jnp.dtype(logits.dtype).itemsize
    # Rows per chunk so one chunk == whole native (sublane, lane) tiles.
    sub = 8 if l_item >= 4 else (16 if l_item == 2 else 32)
    quantum = sub * 128

    # Targets: integer, at most 32-bit (the kernel widens to int32 in VMEM).
    if (not jnp.issubdtype(targets.dtype, jnp.integer)) or \
            jnp.dtype(targets.dtype).itemsize > 4:
        targets = targets.astype(jnp.int32)

    logits_f = logits.reshape(B, C, M)        # free reshapes (native layout)
    targets_f = targets.reshape(B, M)

    # Pad the voxel axis to a multiple of sub*128 (only for ragged volumes).
    M_pad = ((M + quantum - 1) // quantum) * quantum
    mask_vox = M_pad != M
    if mask_vox:
        pad = M_pad - M
        logits_f = jnp.pad(logits_f, ((0, 0), (0, 0), (0, pad)))
        targets_f = jnp.pad(targets_f.astype(jnp.int32), ((0, 0), (0, pad)),
                            constant_values=C)       # sentinel label == C (matches no class)
    G = M_pad // 128

    # Keep narrow label dtypes only if chunk slices stay tile-aligned.
    # TODO(synk): keep int8 labels native (needs sub % 32 == 0 slices) to cut
    # targets HBM reads another 4x once narrow sublane slices are exercised.
    t_item = jnp.dtype(targets_f.dtype).itemsize
    if sub % (32 // t_item) != 0:
        targets_f = targets_f.astype(jnp.int32)
        t_item = 4

    GS = G // sub
    logits_g = logits_f.reshape(B, C, GS, sub, 128)
    targets_g = targets_f.reshape(B, GS, sub, 128)

    # --- tile sizing (exact per-buffer VMEM formula, packed layout => no hidden
    # sublane padding).  Budget is conservative for v7x's 64 MiB VMEM.
    row_bytes = 128 * (C * l_item + t_item)              # one 128-voxel group-row
    buf_budget = 16 * 1024 * 1024                        # double-buffered input tiles
    tm_cap = max(sub, (buf_budget // (2 * row_bytes)) // sub * sub)
    tm_target = max(sub, (tile_vox // 128) // sub * sub)
    tm = min(tm_target, tm_cap, G)
    if G % tm != 0:
        # Prefer a tile that divides G exactly -> static loop bounds, no ragged tile.
        for d in range(tm, max(sub, tm // 4) - 1, -sub):
            if G % d == 0:
                tm = d
                break
    n_chunks = tm // sub
    n_tiles = pl.cdiv(G, tm)

    clean_rows = (M // 128) if mask_vox else G            # rows that are fully real
    total_rows = -(-M // 128)                             # rows with any real voxel
    static_exact = (not mask_vox) and (G % tm == 0)
    unroll = min(8, n_chunks)

    # 2-way voxel split so both v7x TensorCores get work when B == 1.
    P = 2 if (B == 1 and n_tiles >= 2 and n_tiles % 2 == 0) else 1
    T = n_tiles // P

    kernel = functools.partial(
        _dice_stats_kernel,
        C=C, sub=sub, tm=tm, T=T, n_chunks=n_chunks,
        clean_rows=clean_rows, total_rows=total_rows,
        mask_vox=mask_vox, static_exact=static_exact, unroll=unroll)

    grid_spec = pltpu.PrefetchScalarGridSpec(
        num_scalar_prefetch=0,
        grid=(B, P, T),
        in_specs=[
            pl.BlockSpec((None, C, n_chunks, sub, 128),
                         lambda b, p, t: (b, 0, p * T + t, 0, 0)),
            pl.BlockSpec((None, n_chunks, sub, 128),
                         lambda b, p, t: (b, p * T + t, 0, 0)),
        ],
        out_specs=[
            pl.BlockSpec((None, None, C, sub, 128),
                         lambda b, p, t: (b, p, 0, 0, 0)),
            pl.BlockSpec((None, None, C, sub, 128),
                         lambda b, p, t: (b, p, 0, 0, 0)),
        ],
    )

    inter_p, card_p = pl.pallas_call(
        kernel,
        out_shape=(
            jax.ShapeDtypeStruct((B, P, C, sub, 128), jnp.float32),
            jax.ShapeDtypeStruct((B, P, C, sub, 128), jnp.float32),
        ),
        grid_spec=grid_spec,
        compiler_params=pltpu.CompilerParams(
            dimension_semantics=("parallel", "parallel", "arbitrary"),
            vmem_limit_bytes=32 * 1024 * 1024,
        ),
    )(logits_g, targets_g)

    intersection = jnp.sum(inter_p, axis=(0, 1, 3, 4))    # (C,)
    cardinality = jnp.sum(card_p, axis=(0, 1, 3, 4))      # (C,)
    dice_coef = (2.0 * intersection + smooth) / (cardinality + smooth)
    if weight is not None:
        w = jnp.asarray(weight, dtype=jnp.float32)
        return 1.0 - jnp.sum(dice_coef * w) / jnp.sum(w)
    return 1.0 - jnp.mean(dice_coef)


def _dice_loss_ref(logits, targets, weight=None, smooth=1e-5):
    """Pure-JAX reference mirroring the PyTorch module."""
    num_classes = logits.shape[1]
    onehot = jax.nn.one_hot(targets, num_classes, dtype=jnp.float32)  # (B,D,H,W,C)
    onehot = jnp.moveaxis(onehot, -1, 1)                              # (B,C,D,H,W)
    probs = jax.nn.softmax(logits.astype(jnp.float32), axis=1)
    inter = jnp.sum(probs * onehot, axis=(0, 2, 3, 4))
    card = jnp.sum(probs + onehot, axis=(0, 2, 3, 4))
    dice = (2.0 * inter + smooth) / (card + smooth)
    if weight is not None:
        w = jnp.asarray(weight, jnp.float32)
        return 1.0 - jnp.sum(dice * w) / jnp.sum(w)
    return 1.0 - jnp.mean(dice)


if __name__ == "__main__":
    key = jax.random.PRNGKey(0)
    k1, k2 = jax.random.split(key)

    # Test 1: f32 logits, clean fast path (M = 1024 -> packed layout, static
    # loop bounds, zero masking), plus the class-weighted branch.
    B, C, D, H, W = 2, 4, 4, 16, 16
    logits = jax.random.normal(k1, (B, C, D, H, W), dtype=jnp.float32)
    targets = jax.random.randint(k2, (B, D, H, W), 0, C, dtype=jnp.int32)

    loss = jax.block_until_ready(dice_loss(logits, targets))
    ref = _dice_loss_ref(logits, targets)
    assert jnp.allclose(loss, ref, atol=1e-5, rtol=1e-5), (loss, ref)

    w = jnp.array([0.1, 0.2, 0.3, 0.4], dtype=jnp.float32)
    loss_w = jax.block_until_ready(dice_loss(logits, targets, weight=w))
    ref_w = _dice_loss_ref(logits, targets, weight=w)
    assert jnp.allclose(loss_w, ref_w, atol=1e-5, rtol=1e-5), (loss_w, ref_w)

    # Test 2: bf16 logits + int8 labels + ragged voxel count (M = 300) to hit
    # the padded sentinel / masked-tail path.
    B2, C2, D2, H2, W2 = 1, 3, 3, 10, 10
    logits2 = jax.random.normal(k1, (B2, C2, D2, H2, W2), dtype=jnp.bfloat16)
    targets2 = jax.random.randint(k2, (B2, D2, H2, W2), 0, C2, dtype=jnp.int8)

    loss2 = jax.block_until_ready(dice_loss(logits2, targets2))
    ref2 = _dice_loss_ref(logits2, targets2)
    assert jnp.allclose(loss2, ref2, atol=1e-4, rtol=1e-4), (loss2, ref2)

    # Test 3: B == 1 with several voxel tiles -> exercises the 2-way "parallel"
    # tile split (both TensorCores on v7x get work).
    B3, C3, D3, H3, W3 = 1, 2, 8, 16, 16
    logits3 = jax.random.normal(k1, (B3, C3, D3, H3, W3), dtype=jnp.float32)
    targets3 = jax.random.randint(k2, (B3, D3, H3, W3), 0, C3, dtype=jnp.int32)

    loss3 = jax.block_until_ready(dice_loss(logits3, targets3, tile_vox=1024))
    ref3 = _dice_loss_ref(logits3, targets3)
    assert jnp.allclose(loss3, ref3, atol=1e-5, rtol=1e-5), (loss3, ref3)

    print("KERNEL_OK")
</pallas_src>

<mosaic_0001>
module attributes {stable_mosaic.version = 11 : i64} {
  func.func @_dice_stats_kernel(%arg0: i32, %arg1: i32, %arg2: i32, %arg3: memref<1x4x1x8x128xf32, #tpu.memory_space<vmem>>, %arg4: memref<1x1x8x128xi32, #tpu.memory_space<vmem>>, %arg5: memref<1x1x4x8x128xf32, #tpu.memory_space<vmem>>, %arg6: memref<1x1x4x8x128xf32, #tpu.memory_space<vmem>>) attributes {dimension_semantics = [#tpu.dimension_semantics<parallel>, #tpu.dimension_semantics<parallel>, #tpu.dimension_semantics<arbitrary>], iteration_bounds = array<i64: 2, 1, 1>, scalar_prefetch = 0 : i64, scratch_operands = 0 : i64, tpu.core_type = #tpu.core_type<tc>, window_params = [{transform_indices = @transform_0, window_bounds = array<i64: 1, 4, 1, 8, 128>}, {transform_indices = @transform_1, window_bounds = array<i64: 1, 1, 8, 128>}, {transform_indices = @transform_2, window_bounds = array<i64: 1, 1, 4, 8, 128>}, {transform_indices = @transform_3, window_bounds = array<i64: 1, 1, 4, 8, 128>}]} {
    %c0_i32 = arith.constant 0 : i32
    %0 = arith.cmpi eq, %arg2, %c0_i32 : i32
    %1 = arith.extui %0 : i1 to i32
    %c0_i32_0 = arith.constant 0 : i32
    %2 = arith.cmpi ne, %1, %c0_i32_0 : i32
    scf.if %2 {
      %cst_31 = arith.constant 0.000000e+00 : f32
      %46 = vector.broadcast %cst_31 : f32 to vector<4x8x128xf32>
      %c0_32 = arith.constant 0 : index
      %c0_33 = arith.constant 0 : index
      %c0_34 = arith.constant 0 : index
      %c0_35 = arith.constant 0 : index
      %c0_36 = arith.constant 0 : index
      %47 = vector.load %arg5[%c0_32, %c0_33, %c0_34, %c0_35, %c0_36] : memref<1x1x4x8x128xf32, #tpu.memory_space<vmem>>, vector<1x1x4x8x128xf32>
      %48 = vector.shape_cast %47 : vector<1x1x4x8x128xf32> to vector<4x8x128xf32>
      %49 = vector.shape_cast %46 : vector<4x8x128xf32> to vector<1x1x4x8x128xf32>
      tpu.vector_store %arg5[%c0_32, %c0_33, %c0_34, %c0_35, %c0_36], %49 {strides = array<i32>} : memref<1x1x4x8x128xf32, #tpu.memory_space<vmem>>, vector<1x1x4x8x128xf32>,
      %cst_37 = arith.constant 0.000000e+00 : f32
      %50 = vector.broadcast %cst_37 : f32 to vector<4x8x128xf32>
      %c0_38 = arith.constant 0 : index
      %c0_39 = arith.constant 0 : index
      %c0_40 = arith.constant 0 : index
      %c0_41 = arith.constant 0 : index
      %c0_42 = arith.constant 0 : index
      %51 = vector.load %arg6[%c0_38, %c0_39, %c0_40, %c0_41, %c0_42] : memref<1x1x4x8x128xf32, #tpu.memory_space<vmem>>, vector<1x1x4x8x128xf32>
      %52 = vector.shape_cast %51 : vector<1x1x4x8x128xf32> to vector<4x8x128xf32>
      %53 = vector.shape_cast %50 : vector<4x8x128xf32> to vector<1x1x4x8x128xf32>
      tpu.vector_store %arg6[%c0_38, %c0_39, %c0_40, %c0_41, %c0_42], %53 {strides = array<i32>} : memref<1x1x4x8x128xf32, #tpu.memory_space<vmem>>, vector<1x1x4x8x128xf32>,
    } else {
    }
    %3 = tpu.iota {dimensions = array<i32: 0>} : vector<4x8x128xi32>
    %cst = arith.constant 0.000000e+00 : f32
    %4 = vector.broadcast %cst : f32 to vector<4x8x128xf32>
    %c0_i32_1 = arith.constant 0 : i32
    %c0 = arith.constant 0 : index
    %c0_2 = arith.constant 0 : index
    %5 = arith.index_cast %c0_i32_1 : i32 to index
    %c0_3 = arith.constant 0 : index
    %c0_4 = arith.constant 0 : index
    %6 = vector.load %arg3[%c0, %c0_2, %5, %c0_3, %c0_4] : memref<1x4x1x8x128xf32, #tpu.memory_space<vmem>>, vector<1x4x1x8x128xf32>
    %7 = vector.shape_cast %6 : vector<1x4x1x8x128xf32> to vector<4x8x128xf32>
    %c0_5 = arith.constant 0 : index
    %8 = arith.index_cast %c0_i32_1 : i32 to index
    %c0_6 = arith.constant 0 : index
    %c0_7 = arith.constant 0 : index
    %9 = vector.load %arg4[%c0_5, %8, %c0_6, %c0_7] : memref<1x1x8x128xi32, #tpu.memory_space<vmem>>, vector<1x1x8x128xi32>
    %10 = vector.shape_cast %9 : vector<1x1x8x128xi32> to vector<8x128xi32>
    %cst_8 = arith.constant dense<0xFF800000> : vector<8x128xf32>
    %11 = vector.multi_reduction <maximumf>, %7, %cst_8 [0] : vector<4x8x128xf32> to vector<8x128xf32>
    %12 = vector.shape_cast %11 : vector<8x128xf32> to vector<1x8x128xf32>
    %13 = vector.broadcast %12 : vector<1x8x128xf32> to vector<4x8x128xf32>
    %14 = arith.subf %7, %13 : vector<4x8x128xf32>
    %15 = math.exp %14 : vector<4x8x128xf32>
    %cst_9 = arith.constant dense<0.000000e+00> : vector<8x128xf32>
    %16 = vector.multi_reduction <add>, %15, %cst_9 [0] : vector<4x8x128xf32> to vector<8x128xf32>
    %17 = tpu.reciprocal %16 {approx = true} : vector<8x128xf32> -> vector<8x128xf32>
    %18 = arith.mulf %16, %17 : vector<8x128xf32>
    %cst_10 = arith.constant 2.000000e+00 : f32
    %19 = vector.broadcast %cst_10 : f32 to vector<8x128xf32>
    %20 = arith.subf %19, %18 : vector<8x128xf32>
    %21 = arith.mulf %17, %20 : vector<8x128xf32>
    %22 = vector.shape_cast %21 : vector<8x128xf32> to vector<1x8x128xf32>
    %23 = vector.broadcast %22 : vector<1x8x128xf32> to vector<4x8x128xf32>
    %24 = arith.mulf %15, %23 : vector<4x8x128xf32>
    %25 = vector.shape_cast %10 : vector<8x128xi32> to vector<1x8x128xi32>
    %26 = vector.broadcast %25 : vector<1x8x128xi32> to vector<4x8x128xi32>
    %27 = arith.cmpi eq, %3, %26 : vector<4x8x128xi32>
    %28 = arith.extui %27 : vector<4x8x128xi1> to vector<4x8x128xi32>
    %29 = arith.sitofp %28 : vector<4x8x128xi32> to vector<4x8x128xf32>
    %30 = arith.mulf %24, %29 : vector<4x8x128xf32>
    %31 = arith.addf %4, %30 : vector<4x8x128xf32>
    %32 = arith.addf %24, %29 : vector<4x8x128xf32>
    %33 = arith.addf %4, %32 : vector<4x8x128xf32>
    %c1_i32 = arith.constant 1 : i32
    %c0_11 = arith.constant 0 : index
    %c0_12 = arith.constant 0 : index
    %c0_13 = arith.constant 0 : index
    %c0_14 = arith.constant 0 : index
    %c0_15 = arith.constant 0 : index
    %34 = vector.load %arg5[%c0_11, %c0_12, %c0_13, %c0_14, %c0_15] : memref<1x1x4x8x128xf32, #tpu.memory_space<vmem>>, vector<1x1x4x8x128xf32>
    %35 = vector.shape_cast %34 : vector<1x1x4x8x128xf32> to vector<4x8x128xf32>
    %36 = arith.addf %35, %31 : vector<4x8x128xf32>
    %c0_16 = arith.constant 0 : index
    %c0_17 = arith.constant 0 : index
    %c0_18 = arith.constant 0 : index
    %c0_19 = arith.constant 0 : index
    %c0_20 = arith.constant 0 : index
    %37 = vector.load %arg5[%c0_16, %c0_17, %c0_18, %c0_19, %c0_20] : memref<1x1x4x8x128xf32, #tpu.memory_space<vmem>>, vector<1x1x4x8x128xf32>
    %38 = vector.shape_cast %37 : vector<1x1x4x8x128xf32> to vector<4x8x128xf32>
    %39 = vector.shape_cast %36 : vector<4x8x128xf32> to vector<1x1x4x8x128xf32>
    tpu.vector_store %arg5[%c0_16, %c0_17, %c0_18, %c0_19, %c0_20], %39 {strides = array<i32>} : memref<1x1x4x8x128xf32, #tpu.memory_space<vmem>>, vector<1x1x4x8x128xf32>,
    %c0_21 = arith.constant 0 : index
    %c0_22 = arith.constant 0 : index
    %c0_23 = arith.constant 0 : index
    %c0_24 = arith.constant 0 : index
    %c0_25 = arith.constant 0 : index
    %40 = vector.load %arg6[%c0_21, %c0_22, %c0_23, %c0_24, %c0_25] : memref<1x1x4x8x128xf32, #tpu.memory_space<vmem>>, vector<1x1x4x8x128xf32>
    %41 = vector.shape_cast %40 : vector<1x1x4x8x128xf32> to vector<4x8x128xf32>
    %42 = arith.addf %41, %33 : vector<4x8x128xf32>
    %c0_26 = arith.constant 0 : index
    %c0_27 = arith.constant 0 : index
    %c0_28 = arith.constant 0 : index
    %c0_29 = arith.constant 0 : index
    %c0_30 = arith.constant 0 : index
    %43 = vector.load %arg6[%c0_26, %c0_27, %c0_28, %c0_29, %c0_30] : memref<1x1x4x8x128xf32, #tpu.memory_space<vmem>>, vector<1x1x4x8x128xf32>
    %44 = vector.shape_cast %43 : vector<1x1x4x8x128xf32> to vector<4x8x128xf32>
    %45 = vector.shape_cast %42 : vector<4x8x128xf32> to vector<1x1x4x8x128xf32>
    tpu.vector_store %arg6[%c0_26, %c0_27, %c0_28, %c0_29, %c0_30], %45 {strides = array<i32>} : memref<1x1x4x8x128xf32, #tpu.memory_space<vmem>>, vector<1x1x4x8x128xf32>,
    return
  }
  func.func @transform_0(%arg0: i32, %arg1: i32, %arg2: i32) -> (i32, i32, i32, i32, i32) {
    %c1_i32 = arith.constant 1 : i32
    %0 = arith.muli %arg1, %c1_i32 : i32
    %1 = arith.addi %0, %arg2 : i32
    %c0_i32 = arith.constant 0 : i32
    %c0_i32_0 = arith.constant 0 : i32
    %c0_i32_1 = arith.constant 0 : i32
    %c0_i32_2 = arith.constant 0 : i32
    return %arg0, %c0_i32, %1, %c0_i32_0, %c0_i32_1 : i32, i32, i32, i32, i32
  }
  func.func @transform_1(%arg0: i32, %arg1: i32, %arg2: i32) -> (i32, i32, i32, i32) {
    %c1_i32 = arith.constant 1 : i32
    %0 = arith.muli %arg1, %c1_i32 : i32
    %1 = arith.addi %0, %arg2 : i32
    %c0_i32 = arith.constant 0 : i32
    %c0_i32_0 = arith.constant 0 : i32
    %c0_i32_1 = arith.constant 0 : i32
    return %arg0, %1, %c0_i32, %c0_i32_0 : i32, i32, i32, i32
  }
  func.func @transform_2(%arg0: i32, %arg1: i32, %arg2: i32) -> (i32, i32, i32, i32, i32) {
    %c0_i32 = arith.constant 0 : i32
    %c0_i32_0 = arith.constant 0 : i32
    %c0_i32_1 = arith.constant 0 : i32
    %c0_i32_2 = arith.constant 0 : i32
    return %arg0, %arg1, %c0_i32, %c0_i32_0, %c0_i32_1 : i32, i32, i32, i32, i32
  }
  func.func @transform_3(%arg0: i32, %arg1: i32, %arg2: i32) -> (i32, i32, i32, i32, i32) {
    %c0_i32 = arith.constant 0 : i32
    %c0_i32_0 = arith.constant 0 : i32
    %c0_i32_1 = arith.constant 0 : i32
    %c0_i32_2 = arith.constant 0 : i32
    return %arg0, %arg1, %c0_i32, %c0_i32_0, %c0_i32_1 : i32, i32, i32, i32, i32
  }
}

</mosaic_0001>

<llo_original>
// kernel: dice_loss.1
$region0: #{dice_loss.1}
  #allocation0 [shape = 'u32[]', space=smem, size = 0x4, offset = 0x4, fixed_abs, tag = 'smem constant byte address 0x4 - core index']
  #allocation1 [shape = 'u32[72,128]{1,0:T(1,128)}', space=vmem, size = 0x9000, scoped, tag = 'internal scratch']
  %s0 = inlined_call_operand.vmem [shape: f32[2,4,1,8,128], index: 0, kind: input, shape index: {}]
  %s1 = inlined_call_operand.vmem [shape: s32[2,1,8,128], index: 1, kind: input, shape index: {}]
  %s2 = inlined_call_operand.vmem [shape: f32[2,1,4,8,128], index: 2, kind: output, shape index: {0}]
  %s3 = inlined_call_operand.vmem [shape: f32[2,1,4,8,128], index: 3, kind: output, shape index: {1}]
  %4 = xla_tuple %s2, %s3
  %s5 = sld [smem:[#allocation0]]
  $region53: #{dice_loss.1} parent=0
    _
  %s7 = ssub.s32 1, %s5
  %s8 = scalar_select 0, %s7, %s5
  loop: start=0, step=1, limit=4
  $region2: #{dice_loss.1} parent=0 // loop_pre_header
    _
  $region3: #{dice_loss.1} parent=0 // loop_header
    %s10 = sphi 0, %s14
    %p11 = scmp.ge.s32.totalorder %s10, 4
    %s17 = sphi 0, %s36
    %s18 = sphi 0, %s32
    %s19 = sphi 0, %s28
    %s20 = sphi 0, %s17
    %s21 = sphi 0, %s18
    %s22 = sphi 0, %s19
    %s23 = sphi 0, %s20
    %s24 = sphi 0, %s21
    %s25 = sphi 0, %s22
    %s43 = sphi 0, %s45
    %s46 = sphi 0, %s43
    %s47 = sphi 0, %s46
    %s63 = sphi 0, %s47
    %s73 = sphi 0, %s75
    %s76 = sphi 0, %s73
    %s77 = sphi 0, %s76
    %s93 = sphi 0, %s77
    %s101 = sphi 0, %s103
    %s104 = sphi 0, %s101
    %s105 = sphi 0, %s104
    %s121 = sphi 0, %s105
    %s129 = sphi 0, %s131
    %s132 = sphi 0, %s129
    %s133 = sphi 0, %s132
    %s149 = sphi 0, %s133
  $region4: #{dice_loss.1} parent=0 // loop_header_branch
    %13 = sbr.rel (%p11) target = $region8
  $region5: #{dice_loss.1} parent=0 // loop_body
    %s15 = ssub.s32 %s10, 1
    %s16 = ssub.s32 %s10, 2
    %s26 = sadd.s32 1, %s19
    %p27 = scmp.ge.s32.totalorder %s26, 1
    %s28 = scalar_select %p27, 0, %s26
    %s29 = sadd.s32 1, %s18
    %s30 = scalar_select %p27, %s29, %s18
    %p31 = scmp.ge.s32.totalorder %s30, 1
    %s32 = scalar_select %p31, 0, %s30
    %s33 = sadd.s32 1, %s17
    %s34 = scalar_select %p31, %s33, %s17
    %p35 = scmp.ge.s32.totalorder %s34, 2
    %s36 = scalar_select %p35, 0, %s34
    %s37 = sadd.s32 %s18, %s19
    %s38 = sadd.s32 %s32, %s28
    %s39 = ssub.s32 %s17, %s36
    %s40 = ssub.s32 %s37, %s38
    %s41 = sor.u32 %s39, %s40
    %p42 = scmp.eq.s32.totalorder %s41, 0
    %s44 = sadd.s32 %s43, 1
    %s45 = scalar_select %p42, %s43, %s44
    %p48 = pneg %p42
    %p49 = scmp.eq.s32.totalorder %s10, 1
    %p50 = por %p48, %p49
    %p51 = scmp.ne.s32.totalorder %s43, %s46
    %p52 = scmp.eq.s32.totalorder %s10, 0
    %p53 = por %p51, %p52
    %p54 = scmp.ne.s32.totalorder %s43, %s46
    %p55 = scmp.eq.s32.totalorder %s15, 1
    %p56 = por %p54, %p55
    %p57 = scmp.ne.s32.totalorder %s46, %s47
    %p58 = scmp.eq.s32.totalorder %s15, 0
    %p59 = por %p57, %p58
    %p60 = scmp.ne.s32.totalorder %s46, %s47
    %p61 = scmp.eq.s32.totalorder %s16, 1
    %p62 = por %p60, %p61
    %p64 = scmp.ne.s32.totalorder %s47, %s63
    %p65 = scmp.eq.s32.totalorder %s16, 0
    %p66 = por %p64, %p65
    %s67 = sadd.s32 %s18, %s19
    %s68 = sadd.s32 %s32, %s28
    %s69 = ssub.s32 %s17, %s36
    %s70 = ssub.s32 %s67, %s68
    %s71 = sor.u32 %s69, %s70
    %p72 = scmp.eq.s32.totalorder %s71, 0
    %s74 = sadd.s32 %s73, 1
    %s75 = scalar_select %p72, %s73, %s74
    %p78 = pneg %p72
    %p79 = scmp.eq.s32.totalorder %s10, 1
    %p80 = por %p78, %p79
    %p81 = scmp.ne.s32.totalorder %s73, %s76
    %p82 = scmp.eq.s32.totalorder %s10, 0
    %p83 = por %p81, %p82
    %p84 = scmp.ne.s32.totalorder %s73, %s76
    %p85 = scmp.eq.s32.totalorder %s15, 1
    %p86 = por %p84, %p85
    %p87 = scmp.ne.s32.totalorder %s76, %s77
    %p88 = scmp.eq.s32.totalorder %s15, 0
    %p89 = por %p87, %p88
    %p90 = scmp.ne.s32.totalorder %s76, %s77
    %p91 = scmp.eq.s32.totalorder %s16, 1
    %p92 = por %p90, %p91
    %p94 = scmp.ne.s32.totalorder %s77, %s93
    %p95 = scmp.eq.s32.totalorder %s16, 0
    %p96 = por %p94, %p95
    %s97 = ssub.s32 %s17, %s36
    %s98 = ssub.s32 %s18, %s32
    %s99 = sor.u32 %s97, %s98
    %p100 = scmp.eq.s32.totalorder %s99, 0
    %s102 = sadd.s32 %s101, 1
    %s103 = scalar_select %p100, %s101, %s102
    %p106 = pneg %p100
    %p107 = scmp.eq.s32.totalorder %s10, 1
    %p108 = por %p106, %p107
    %p109 = scmp.ne.s32.totalorder %s101, %s104
    %p110 = scmp.eq.s32.totalorder %s10, 0
    %p111 = por %p109, %p110
    %p112 = scmp.ne.s32.totalorder %s101, %s104
    %p113 = scmp.eq.s32.totalorder %s15, 1
    %p114 = por %p112, %p113
    %p115 = scmp.ne.s32.totalorder %s104, %s105
    %p116 = scmp.eq.s32.totalorder %s15, 0
    %p117 = por %p115, %p116
    %p118 = scmp.ne.s32.totalorder %s104, %s105
    %p119 = scmp.eq.s32.totalorder %s16, 1
    %p120 = por %p118, %p119
    %p122 = scmp.ne.s32.totalorder %s105, %s121
    %p123 = scmp.eq.s32.totalorder %s16, 0
    %p124 = por %p122, %p123
    %s125 = ssub.s32 %s17, %s36
    %s126 = ssub.s32 %s18, %s32
    %s127 = sor.u32 %s125, %s126
    %p128 = scmp.eq.s32.totalorder %s127, 0
    %s130 = sadd.s32 %s129, 1
    %s131 = scalar_select %p128, %s129, %s130
    %p134 = pneg %p128
    %p135 = scmp.eq.s32.totalorder %s10, 1
    %p136 = por %p134, %p135
    %p137 = scmp.ne.s32.totalorder %s129, %s132
    %p138 = scmp.eq.s32.totalorder %s10, 0
    %p139 = por %p137, %p138
    %p140 = scmp.ne.s32.totalorder %s129, %s132
    %p141 = scmp.eq.s32.totalorder %s15, 1
    %p142 = por %p140, %p141
    %p143 = scmp.ne.s32.totalorder %s132, %s133
    %p144 = scmp.eq.s32.totalorder %s15, 0
    %p145 = por %p143, %p144
    %p146 = scmp.ne.s32.totalorder %s132, %s133
    %p147 = scmp.eq.s32.totalorder %s16, 1
    %p148 = por %p146, %p147
    %p150 = scmp.ne.s32.totalorder %s133, %s149
    %p151 = scmp.eq.s32.totalorder %s16, 0
    %p152 = por %p150, %p151
    %p153 = scmp.le.s32.totalorder 1, %s10
    %p154 = scmp.lt.s32.totalorder %s10, 3
    %p155 = pnand %p153, %p154
    %p156 = pneg %p155
    // Predicated region
    $region9: #{dice_loss.1} parent=5 // pred_check
      _
    $region10: #{dice_loss.1} parent=5 // pred_check_branch
      %158 = sbr.rel (%p155) target = $region12
    $region11: #{dice_loss.1} parent=5 // pred_region
      %s159 = ssub.s32 %s10, 1
    $region12: #{dice_loss.1} parent=5 // pred_fallthru
      _
    %p160 = scmp.lt.s32.totalorder %s10, 2
    // Predicated region
    $region13: #{dice_loss.1} parent=5 // pred_check
      %p161 = pneg %p160
    $region14: #{dice_loss.1} parent=5 // pred_check_branch
      %163 = sbr.rel (%p161) target = $region16
    $region15: #{dice_loss.1} parent=5 // pred_region
      // Predicated region
      $region17: #{dice_loss.1} parent=15 // pred_check
        %p164 = pneg %p53
      $region18: #{dice_loss.1} parent=15 // pred_check_branch
        %166 = sbr.rel (%p164) target = $region20
      $region19: #{dice_loss.1} parent=15 // pred_region
        %s167 = sadd.s32 %s18, %s19
        %p168 = scmp.lt.s32.totalorder %s17, 1
        %s169 = scalar_select %p168, %s17, 1
        %p170 = scmp.lt.s32.totalorder %s167, 0
        %s171 = scalar_select %p170, %s167, 0
        %s172 = smul.addr %s169, 4
        %s173 = sadd.s32 %s171, %s172
        %s174 = smul.addr %s173, 8
        %s175 = scalar_lea.vmem %s0, %s174
        %s176 = sadd.s32 %s18, %s19
      $region20: #{dice_loss.1} parent=15 // pred_fallthru
        _
      // Predicated region
      $region21: #{dice_loss.1} parent=15 // pred_check
        %p177 = pneg %p83
      $region22: #{dice_loss.1} parent=15 // pred_check_branch
        %179 = sbr.rel (%p177) target = $region24
      $region23: #{dice_loss.1} parent=15 // pred_region
        %s180 = sadd.s32 %s18, %s19
        %p181 = scmp.lt.s32.totalorder %s17, 1
        %s182 = scalar_select %p181, %s17, 1
        %p183 = scmp.lt.s32.totalorder %s180, 0
        %s184 = scalar_select %p183, %s180, 0
        %s185 = sadd.s32 %s184, %s182
        %s186 = smul.addr %s185, 8
        %s187 = scalar_lea.vmem %s1, %s186
        %s188 = sadd.s32 %s18, %s19
      $region24: #{dice_loss.1} parent=15 // pred_fallthru
        _
    $region16: #{dice_loss.1} parent=5 // pred_fallthru
      _
    %p189 = scmp.le.s32.totalorder 1, %s10
    %p190 = scmp.lt.s32.totalorder %s10, 3
    %p191 = pnand %p189, %p190
    %p192 = pneg %p191
    // Predicated region
    $region25: #{dice_loss.1} parent=5 // pred_check
      _
    $region26: #{dice_loss.1} parent=5 // pred_check_branch
      %194 = sbr.rel (%p191) target = $region28
    $region27: #{dice_loss.1} parent=5 // pred_region
      %s195 = ssub.s32 %s10, 1
      %s196 = sadd.s32 %s21, %s22
      %p197 = scmp.lt.s32.totalorder %s20, 1
      %s198 = scalar_select %p197, %s20, 1
      %p199 = scmp.lt.s32.totalorder %s196, 0
      %s200 = scalar_select %p199, %s196, 0
      %s201 = smul.addr %s198, 4
      %s202 = sadd.s32 %s200, %s201
      %s203 = smul.addr %s202, 8
      %s204 = scalar_lea.vmem %s0, %s203
      %p205 = pneg %p59
      %p206 = pneg %p56
      %s207 = sadd.s32 %s21, %s22
      %p208 = scmp.lt.s32.totalorder %s20, 1
      %s209 = scalar_select %p208, %s20, 1
      %p210 = scmp.lt.s32.totalorder %s207, 0
      %s211 = scalar_select %p210, %s207, 0
      %s212 = sadd.s32 %s211, %s209
      %s213 = smul.addr %s212, 8
      %s214 = scalar_lea.vmem %s1, %s213
      %p215 = pneg %p89
      %p216 = pneg %p86
      %p217 = pneg %p117
      %p218 = pneg %p114
      %p219 = scmp.lt.s32.totalorder %s20, 1
      %s220 = scalar_select %p219, %s20, 1
      %p221 = scmp.lt.s32.totalorder %s21, 0
      %s222 = scalar_select %p221, %s21, 0
      %s223 = smul.addr %s222, 4
      %s224 = smul.addr %s220, 4
      %s225 = sadd.s32 %s223, %s224
      %s226 = smul.addr %s225, 8
      %s227 = scalar_lea.vmem %s2, %s226
      %p228 = pneg %p145
      %p229 = pneg %p142
      %p230 = scmp.lt.s32.totalorder %s20, 1
      %s231 = scalar_select %p230, %s20, 1
      %p232 = scmp.lt.s32.totalorder %s21, 0
      %s233 = scalar_select %p232, %s21, 0
      %s234 = smul.addr %s233, 4
      %s235 = smul.addr %s231, 4
      %s236 = sadd.s32 %s234, %s235
      %s237 = smul.addr %s236, 8
      %s238 = scalar_lea.vmem %s3, %s237
      %s239 = sadd.s32 %s21, %s22
      %p240 = scmp.lt.s32.totalorder %s20, 1
      %s241 = scalar_select %p240, %s20, 1
      %p242 = scmp.lt.s32.totalorder %s239, 0
      %s243 = scalar_select %p242, %s239, 0
      %s244 = smul.addr %s241, 4
      %s245 = sadd.s32 %s243, %s244
      %s246 = smul.addr %s245, 8
      %s247 = scalar_lea.vmem %s0, %s246
      %s248 = sadd.s32 %s21, %s22
      %s249 = sadd.s32 %s21, %s22
      %p250 = scmp.lt.s32.totalorder %s20, 1
      %s251 = scalar_select %p250, %s20, 1
      %p252 = scmp.lt.s32.totalorder %s249, 0
      %s253 = scalar_select %p252, %s249, 0
      %s254 = sadd.s32 %s253, %s251
      %s255 = smul.addr %s254, 8
      %s256 = scalar_lea.vmem %s1, %s255
      %s257 = sadd.s32 %s21, %s22
      %p258 = scmp.lt.s32.totalorder %s20, 1
      %s259 = scalar_select %p258, %s20, 1
      %p260 = scmp.lt.s32.totalorder %s21, 0
      %s261 = scalar_select %p260, %s21, 0
      %s262 = smul.addr %s261, 4
      %s263 = smul.addr %s259, 4
      %s264 = sadd.s32 %s262, %s263
      %s265 = smul.addr %s264, 8
      %s266 = scalar_lea.vmem %s2, %s265
      %p267 = scmp.lt.s32.totalorder %s20, 1
      %s268 = scalar_select %p267, %s20, 1
      %p269 = scmp.lt.s32.totalorder %s21, 0
      %s270 = scalar_select %p269, %s21, 0
      %s271 = smul.addr %s270, 4
      %s272 = smul.addr %s268, 4
      %s273 = sadd.s32 %s271, %s272
      %s274 = smul.addr %s273, 8
      %s275 = scalar_lea.vmem %s3, %s274
      %p276 = scmp.eq.s32.totalorder %s22, 0
      // Predicated region
      $region29: #{dice_loss.1} parent=27 // pred_check
        %p277 = pneg %p276
      $region30: #{dice_loss.1} parent=27 // pred_check_branch
        %279 = sbr.rel (%p277) target = $region32
      $region31: #{dice_loss.1} parent=27 // pred_region
        %280 = vst [vmem:[%s266] sm:$0xff] 0.0
        %281 = vst [vmem:[%s266 + $0x8] sm:$0xff] 0.0
        %282 = vst [vmem:[%s266 + $0x10] sm:$0xff] 0.0
        %283 = vst [vmem:[%s266 + $0x18] sm:$0xff] 0.0
        %284 = vst [vmem:[%s275] sm:$0xff] 0.0
        %285 = vst [vmem:[%s275 + $0x8] sm:$0xff] 0.0
        %286 = vst [vmem:[%s275 + $0x10] sm:$0xff] 0.0
        %287 = vst [vmem:[%s275 + $0x18] sm:$0xff] 0.0
      $region32: #{dice_loss.1} parent=27 // pred_fallthru
        _
      %v288 = vld [vmem:[%s247] sm:$0xff]
      %v289 = vld [vmem:[%s247 + $0x8] sm:$0xff]
      %v290 = vld [vmem:[%s247 + $0x10] sm:$0xff]
      %v291 = vld [vmem:[%s247 + $0x18] sm:$0xff]
      %v292 = vld [vmem:[%s256] sm:$0xff]
      %v293 = vmax.f32 %v288, %v289
      %v294 = vmax.f32 %v290, %v291
      %v295 = vmax.f32 %v293, %v294
      %v296 = vsub.f32 %v288, %v295
      %v297 = vsub.f32 %v289, %v295
      %v298 = vsub.f32 %v290, %v295
      %v299 = vsub.f32 %v291, %v295
      %v300 = vmul.f32 %v296, 1.442695
      %v301 = vpow.pop %v300
      %v302 = vmul.f32 %v297, 1.442695
      %v303 = vpow.pop %v302
      %v304 = vmul.f32 %v298, 1.442695
      %v305 = vpow.pop %v304
      %v306 = vmul.f32 %v299, 1.442695
      %v307 = vpow.pop %v306
      %v308 = vadd.f32 %v301, %v303
      %v309 = vadd.f32 %v308, %v305
      %v310 = vadd.f32 %v309, %v307
      %v311 = vrcp.pop %v310
      %v312 = vmul.f32 %v310, %v311
      %v313 = vsub.f32 2.0, %v312
      %v314 = vmul.f32 %v311, %v313
      %v315 = vmul.f32 %v301, %v314
      %v316 = vmul.f32 %v303, %v314
      %v317 = vmul.f32 %v305, %v314
      %v318 = vmul.f32 %v307, %v314
      %vm319 = vcmp.eq.s32.totalorder %v292, 0
      %vm320 = vcmp.eq.s32.totalorder %v292, 1
      %vm321 = vcmp.eq.s32.totalorder %v292, 2
      %vm322 = vcmp.eq.s32.totalorder %v292, 3
      %v323 = vsel %vm319, 1, 0
      %v324 = vsel %vm320, 1, 0
      %v325 = vsel %vm321, 1, 0
      %v326 = vsel %vm322, 1, 0
      %v327 = vcvt.s32.f32 %v323
      %v328 = vcvt.s32.f32 %v324
      %v329 = vcvt.s32.f32 %v325
      %v330 = vcvt.s32.f32 %v326
      %v331 = vmul.f32 %v315, %v327
      %v332 = vmul.f32 %v316, %v328
      %v333 = vmul.f32 %v317, %v329
      %v334 = vmul.f32 %v318, %v330
      %v335 = vadd.f32 %v331, 0.0
      %v336 = vadd.f32 %v332, 0.0
      %v337 = vadd.f32 %v333, 0.0
      %v338 = vadd.f32 %v334, 0.0
      %v339 = vadd.f32 %v315, %v327
      %v340 = vadd.f32 %v316, %v328
      %v341 = vadd.f32 %v317, %v329
      %v342 = vadd.f32 %v318, %v330
      %v343 = vadd.f32 %v339, 0.0
      %v344 = vadd.f32 %v340, 0.0
      %v345 = vadd.f32 %v341, 0.0
      %v346 = vadd.f32 %v342, 0.0
      %v347 = vld [vmem:[%s266] sm:$0xff]
      %v348 = vld [vmem:[%s266 + $0x8] sm:$0xff]
      %v349 = vld [vmem:[%s266 + $0x10] sm:$0xff]
      %v350 = vld [vmem:[%s266 + $0x18] sm:$0xff]
      %v351 = vadd.f32 %v347, %v335
      %v352 = vadd.f32 %v348, %v336
      %v353 = vadd.f32 %v349, %v337
      %v354 = vadd.f32 %v350, %v338
      %355 = vst [vmem:[%s266] sm:$0xff] %v351
      %356 = vst [vmem:[%s266 + $0x8] sm:$0xff] %v352
      %357 = vst [vmem:[%s266 + $0x10] sm:$0xff] %v353
      %358 = vst [vmem:[%s266 + $0x18] sm:$0xff] %v354
      %v359 = vld [vmem:[%s275] sm:$0xff]
      %v360 = vld [vmem:[%s275 + $0x8] sm:$0xff]
      %v361 = vld [vmem:[%s275 + $0x10] sm:$0xff]
      %v362 = vld [vmem:[%s275 + $0x18] sm:$0xff]
      %v363 = vadd.f32 %v359, %v343
      %v364 = vadd.f32 %v360, %v344
      %v365 = vadd.f32 %v361, %v345
      %v366 = vadd.f32 %v362, %v346
      %367 = vst [vmem:[%s275] sm:$0xff] %v363
      %368 = vst [vmem:[%s275 + $0x8] sm:$0xff] %v364
      %369 = vst [vmem:[%s275 + $0x10] sm:$0xff] %v365
      %370 = vst [vmem:[%s275 + $0x18] sm:$0xff] %v366
      %p371 = scmp.lt.s32.totalorder %s20, 1
      %s372 = scalar_select %p371, %s20, 1
      %p373 = scmp.lt.s32.totalorder %s21, 0
      %s374 = scalar_select %p373, %s21, 0
      %s375 = smul.addr %s374, 4
      %s376 = smul.addr %s372, 4
      %s377 = sadd.s32 %s375, %s376
      %s378 = smul.addr %s377, 8
      %s379 = scalar_lea.vmem %s2, %s378
      %p380 = scmp.lt.s32.totalorder %s20, 1
      %s381 = scalar_select %p380, %s20, 1
      %p382 = scmp.lt.s32.totalorder %s21, 0
      %s383 = scalar_select %p382, %s21, 0
      %s384 = smul.addr %s383, 4
      %s385 = smul.addr %s381, 4
      %s386 = sadd.s32 %s384, %s385
      %s387 = smul.addr %s386, 8
      %s388 = scalar_lea.vmem %s3, %s387
      // Predicated region
      $region33: #{dice_loss.1} parent=27 // pred_check
        %p389 = pneg %p114
      $region34: #{dice_loss.1} parent=27 // pred_check_branch
        %391 = sbr.rel (%p389) target = $region36
      $region35: #{dice_loss.1} parent=27 // pred_region
        _
      $region36: #{dice_loss.1} parent=27 // pred_fallthru
        _
      // Predicated region
      $region37: #{dice_loss.1} parent=27 // pred_check
        %p392 = pneg %p142
      $region38: #{dice_loss.1} parent=27 // pred_check_branch
        %394 = sbr.rel (%p392) target = $region40
      $region39: #{dice_loss.1} parent=27 // pred_region
        _
      $region40: #{dice_loss.1} parent=27 // pred_fallthru
        _
    $region28: #{dice_loss.1} parent=5 // pred_fallthru
      _
    %p395 = scmp.le.s32.totalorder 2, %s10
    // Predicated region
    $region41: #{dice_loss.1} parent=5 // pred_check
      %p396 = pneg %p395
    $region42: #{dice_loss.1} parent=5 // pred_check_branch
      %398 = sbr.rel (%p396) target = $region44
    $region43: #{dice_loss.1} parent=5 // pred_region
      %s399 = ssub.s32 %s10, 2
      // Predicated region
      $region45: #{dice_loss.1} parent=43 // pred_check
        %p400 = pneg %p120
      $region46: #{dice_loss.1} parent=43 // pred_check_branch
        %402 = sbr.rel (%p400) target = $region48
      $region47: #{dice_loss.1} parent=43 // pred_region
        %p403 = scmp.lt.s32.totalorder %s23, 1
        %s404 = scalar_select %p403, %s23, 1
        %p405 = scmp.lt.s32.totalorder %s24, 0
        %s406 = scalar_select %p405, %s24, 0
        %s407 = smul.addr %s406, 4
        %s408 = smul.addr %s404, 4
        %s409 = sadd.s32 %s407, %s408
        %s410 = smul.addr %s409, 8
        %s411 = scalar_lea.vmem %s2, %s410
      $region48: #{dice_loss.1} parent=43 // pred_fallthru
        _
      // Predicated region
      $region49: #{dice_loss.1} parent=43 // pred_check
        %p412 = pneg %p148
      $region50: #{dice_loss.1} parent=43 // pred_check_branch
        %414 = sbr.rel (%p412) target = $region52
      $region51: #{dice_loss.1} parent=43 // pred_region
        %p415 = scmp.lt.s32.totalorder %s23, 1
        %s416 = scalar_select %p415, %s23, 1
        %p417 = scmp.lt.s32.totalorder %s24, 0
        %s418 = scalar_select %p417, %s24, 0
        %s419 = smul.addr %s418, 4
        %s420 = smul.addr %s416, 4
        %s421 = sadd.s32 %s419, %s420
        %s422 = smul.addr %s421, 8
        %s423 = scalar_lea.vmem %s3, %s422
      $region52: #{dice_loss.1} parent=43 // pred_fallthru
        _
    $region44: #{dice_loss.1} parent=5 // pred_fallthru
      _
  $region6: #{dice_loss.1} parent=0 // loop_footer
    %s14 = sadd.s32 1, %s10
  $region7: #{dice_loss.1} parent=0 // loop_footer_branch
    %9 = sbr.rel target = $region3
  $region8: #{dice_loss.1} parent=0 // loop_exit
    _

</llo_original>
